<compile_context>
chip_gen: v7x
topology: tpu7x:2x2x1
jax: 0.10.0
libtpu: 0.0.40
codegen_flags: <defaults>
</compile_context>

<pallas_src>
import functools

import jax
import jax.numpy as jnp
from jax import lax
from jax.experimental import pallas as pl
from jax.experimental.pallas import tpu as pltpu


# ---------------------------------------------------------------------------
# Path A: fully fused kernel -- a whole (block_n, C, HW) slab fits in VMEM.
# ---------------------------------------------------------------------------
def _se_fused_kernel(x_ref, w1t_ref, b1_ref, w2t_ref, b2_ref, o_ref):
    """x_ref: (Nb, C, HW); w1t: (C, se); b1: (1, se); w2t: (se, C); b2: (1, C)."""
    x = x_ref[...]
    xf = x.astype(jnp.float32)
    inv_hw = 1.0 / x.shape[-1]

    # Global average pool over the flattened-spatial (lane) axis -> (Nb, C).
    pooled = jnp.sum(xf, axis=-1) * inv_hw

    # 1x1 conv #1 (C -> se) + bias + ReLU.
    h = jnp.dot(pooled, w1t_ref[...], preferred_element_type=jnp.float32)
    h = jnp.maximum(h + b1_ref[...], 0.0)                         # (Nb, se)

    # 1x1 conv #2 (se -> C) + bias + hsigmoid (= relu6(x + 3) / 6).
    g = jnp.dot(h, w2t_ref[...], preferred_element_type=jnp.float32)
    g = jnp.clip(g + b2_ref[...] + 3.0, 0.0, 6.0) * (1.0 / 6.0)   # (Nb, C)

    # Scale: broadcast the gate along the minor (lane) axis -- cheap on VPU.
    o_ref[...] = (xf * g[:, :, None]).astype(o_ref.dtype)


# ---------------------------------------------------------------------------
# Path B: two-phase path for feature maps too large for a single VMEM slab.
# ---------------------------------------------------------------------------
def _se_pool_gate_kernel(x_ref, w1t_ref, b1_ref, w2t_ref, b2_ref, g_ref,
                         acc_ref, *, hw_total):
    """Phase 1: tiled global-average pool (masked partial tiles) + the two FCs.

    Grid: (N, n_hw_tiles); HW is the reduction axis (resident accumulator).
    x_ref: (1, C, hw_tile); g_ref: (1, C, 1); acc_ref: (1, C) f32 scratch.
    """
    k = pl.program_id(1)

    @pl.when(k == 0)
    def _init():
        acc_ref[...] = jnp.zeros_like(acc_ref)

    x = x_ref[...].astype(jnp.float32)                  # (1, C, hw_tile)
    hw_tile = x.shape[-1]
    lane = lax.broadcasted_iota(jnp.int32, x.shape, dimension=2)
    valid = (k * hw_tile + lane) < hw_total             # mask out-of-range lanes
    acc_ref[...] += jnp.sum(jnp.where(valid, x, 0.0), axis=-1)

    @pl.when(k == pl.num_programs(1) - 1)
    def _finalize():
        pooled = acc_ref[...] * (1.0 / hw_total)        # (1, C)
        h = jnp.dot(pooled, w1t_ref[...], preferred_element_type=jnp.float32)
        h = jnp.maximum(h + b1_ref[...], 0.0)
        g = jnp.dot(h, w2t_ref[...], preferred_element_type=jnp.float32)
        g = jnp.clip(g + b2_ref[...] + 3.0, 0.0, 6.0) * (1.0 / 6.0)
        g_ref[...] = g[:, :, None]                      # (1, C, 1): C on sublanes


def _se_scale_kernel(x_ref, g_ref, o_ref):
    """Phase 2: tiled elementwise scale. x_ref/o_ref: (1, C, hw_tile); g: (1, C, 1)."""
    o_ref[...] = (x_ref[...].astype(jnp.float32) * g_ref[...]).astype(o_ref.dtype)


def _clamp_vmem(nbytes):
    # Keep a sane floor and stay under v7x's 64 MiB per-core VMEM.
    return int(min(max(nbytes, 16 << 20), 64 << 20))


def squeeze_excitation(x, w1, b1, w2, b2, *, block_bytes_budget=8 << 20):
    """SE forward.  x: (N, C, H, W); w1: (se, C); b1: (se,); w2: (C, se); b2: (C,)."""
    N, C, H, W = x.shape
    se = w1.shape[0]
    HW = H * W
    itemsize = jnp.dtype(x.dtype).itemsize

    # Lane-dense flatten of the spatial dims (free reshape for contiguous NCHW).
    x3 = x.reshape(N, C, HW)

    # Pre-transpose weights once (loop-invariant; keeps the MXU feed path clean).
    w1t = jnp.transpose(w1)            # (C, se)
    w2t = jnp.transpose(w2)            # (se, C)
    b1_2d = b1.reshape(1, se)
    b2_2d = b2.reshape(1, C)

    param_bytes = 4 * (w1t.size + w2t.size + b1_2d.size + b2_2d.size)
    bytes_per_sample = C * HW * itemsize

    if bytes_per_sample <= block_bytes_budget:
        # ---- Path A: fused single pass -------------------------------------
        # Largest divisor of N whose (C, HW) slab stays under the block budget
        # (amortizes per-grid-step overhead, gives the tiny FCs M=Nb rows).
        max_nb = max(1, block_bytes_budget // bytes_per_sample)
        block_n = 1
        for d in range(1, N + 1):
            if N % d == 0 and d <= max_nb:
                block_n = d
        n_blocks = N // block_n

        block_bytes = block_n * bytes_per_sample
        vmem_limit = _clamp_vmem(4 * block_bytes + 2 * param_bytes + (2 << 20))

        out3 = pl.pallas_call(
            _se_fused_kernel,
            out_shape=jax.ShapeDtypeStruct((N, C, HW), x.dtype),
            grid_spec=pltpu.PrefetchScalarGridSpec(
                num_scalar_prefetch=0,
                grid=(n_blocks,),
                in_specs=[
                    pl.BlockSpec((block_n, C, HW), lambda i: (i, 0, 0)),
                    pl.BlockSpec((C, se), lambda i: (0, 0)),
                    pl.BlockSpec((1, se), lambda i: (0, 0)),
                    pl.BlockSpec((se, C), lambda i: (0, 0)),
                    pl.BlockSpec((1, C), lambda i: (0, 0)),
                ],
                out_specs=pl.BlockSpec((block_n, C, HW), lambda i: (i, 0, 0)),
            ),
            compiler_params=pltpu.CompilerParams(
                dimension_semantics=("parallel",),
                vmem_limit_bytes=vmem_limit,
            ),
        )(x3, w1t, b1_2d, w2t, b2_2d)
        return out3.reshape(N, C, H, W)

    # ---- Path B: two-phase (pool + gate, then scale) for huge feature maps --
    # Spatial tile: largest multiple of 128 lanes that fits the block budget.
    max_tile = max(128, (block_bytes_budget // (C * itemsize)) // 128 * 128)
    hw_tile = int(min(max_tile, -(-HW // 128) * 128))
    n_hw = pl.cdiv(HW, hw_tile)
    tile_bytes = C * hw_tile * itemsize

    gate = pl.pallas_call(
        functools.partial(_se_pool_gate_kernel, hw_total=HW),
        out_shape=jax.ShapeDtypeStruct((N, C, 1), jnp.float32),
        grid_spec=pltpu.PrefetchScalarGridSpec(
            num_scalar_prefetch=0,
            grid=(N, n_hw),
            in_specs=[
                pl.BlockSpec((1, C, hw_tile), lambda i, k: (i, 0, k)),
                pl.BlockSpec((C, se), lambda i, k: (0, 0)),
                pl.BlockSpec((1, se), lambda i, k: (0, 0)),
                pl.BlockSpec((se, C), lambda i, k: (0, 0)),
                pl.BlockSpec((1, C), lambda i, k: (0, 0)),
            ],
            out_specs=pl.BlockSpec((1, C, 1), lambda i, k: (i, 0, 0)),
            scratch_shapes=[pltpu.VMEM((1, C), jnp.float32)],
        ),
        compiler_params=pltpu.CompilerParams(
            dimension_semantics=("parallel", "arbitrary"),
            vmem_limit_bytes=_clamp_vmem(2 * tile_bytes + 2 * param_bytes + (2 << 20)),
        ),
    )(x3, w1t, b1_2d, w2t, b2_2d)

    out3 = pl.pallas_call(
        _se_scale_kernel,
        out_shape=jax.ShapeDtypeStruct((N, C, HW), x.dtype),
        grid_spec=pltpu.PrefetchScalarGridSpec(
            num_scalar_prefetch=0,
            grid=(N, n_hw),
            in_specs=[
                pl.BlockSpec((1, C, hw_tile), lambda i, k: (i, 0, k)),
                pl.BlockSpec((1, C, 1), lambda i, k: (i, 0, 0)),
            ],
            out_specs=pl.BlockSpec((1, C, hw_tile), lambda i, k: (i, 0, k)),
        ),
        compiler_params=pltpu.CompilerParams(
            dimension_semantics=("parallel", "parallel"),
            vmem_limit_bytes=_clamp_vmem(4 * tile_bytes + (2 << 20)),
        ),
    )(x3, gate)
    return out3.reshape(N, C, H, W)


def _reference(x, w1, b1, w2, b2):
    pooled = jnp.mean(x, axis=(2, 3))                      # (N, C)
    h = jnp.maximum(pooled @ w1.T + b1, 0.0)               # (N, se)
    g = jnp.clip(h @ w2.T + b2 + 3.0, 0.0, 6.0) / 6.0      # (N, C)
    return x * g[:, :, None, None]


if __name__ == "__main__":
    key = jax.random.PRNGKey(0)
    kx, k1, k2, k3, k4 = jax.random.split(key, 5)

    N, C, H, W = 2, 4, 16, 16
    se_planes = 2

    x = jax.random.normal(kx, (N, C, H, W), dtype=jnp.float32)
    # Conv2d(inplanes, se_planes, 1): weight (se_planes, inplanes), bias (se_planes,)
    w1 = jax.random.normal(k1, (se_planes, C), dtype=jnp.float32) * 0.5
    b1 = jax.random.normal(k2, (se_planes,), dtype=jnp.float32) * 0.1
    # Conv2d(se_planes, inplanes, 1): weight (inplanes, se_planes), bias (inplanes,)
    w2 = jax.random.normal(k3, (C, se_planes), dtype=jnp.float32) * 0.5
    b2 = jax.random.normal(k4, (C,), dtype=jnp.float32) * 0.1

    ref = _reference(x, w1, b1, w2, b2)

    # Path A: fused single-pass kernel (the common case).
    out_a = jax.block_until_ready(squeeze_excitation(x, w1, b1, w2, b2))
    assert out_a.shape == (N, C, H, W)
    assert jnp.allclose(out_a, ref, atol=1e-5, rtol=1e-5), "Path A mismatch"

    # Path B: two-phase fallback, forced with a tiny block budget so the
    # large-feature-map path (HW tiling, exactly divisible tiles) is exercised.
    out_b = jax.block_until_ready(
        squeeze_excitation(x, w1, b1, w2, b2, block_bytes_budget=2048))
    assert jnp.allclose(out_b, ref, atol=1e-5, rtol=1e-5), "Path B mismatch"

    # Path B again with a ragged spatial size (H*W not a multiple of the
    # 128-lane tile) to exercise the masked partial-tile pooling.
    H2, W2 = 12, 12
    x2 = jax.random.normal(kx, (N, C, H2, W2), dtype=jnp.float32)
    ref2 = _reference(x2, w1, b1, w2, b2)
    out_c = jax.block_until_ready(
        squeeze_excitation(x2, w1, b1, w2, b2, block_bytes_budget=2048))
    assert jnp.allclose(out_c, ref2, atol=1e-5, rtol=1e-5), "Path B (ragged) mismatch"

    print("KERNEL_OK")
</pallas_src>

<mosaic_0001>
module attributes {stable_mosaic.version = 11 : i64} {
  func.func @_se_fused_kernel(%arg0: i32, %arg1: memref<2x4x256xf32, #tpu.memory_space<vmem>>, %arg2: memref<4x2xf32, #tpu.memory_space<vmem>>, %arg3: memref<1x2xf32, #tpu.memory_space<vmem>>, %arg4: memref<2x4xf32, #tpu.memory_space<vmem>>, %arg5: memref<1x4xf32, #tpu.memory_space<vmem>>, %arg6: memref<2x4x256xf32, #tpu.memory_space<vmem>>) attributes {dimension_semantics = [#tpu.dimension_semantics<parallel>], iteration_bounds = array<i64: 1>, scalar_prefetch = 0 : i64, scratch_operands = 0 : i64, tpu.core_type = #tpu.core_type<tc>, window_params = [{transform_indices = @transform_0, window_bounds = array<i64: 2, 4, 256>}, {pipeline_mode = #tpu.pipeline_mode<synchronous>, transform_indices = @transform_1, window_bounds = array<i64: 4, 2>}, {pipeline_mode = #tpu.pipeline_mode<synchronous>, transform_indices = @transform_2, window_bounds = array<i64: 1, 2>}, {pipeline_mode = #tpu.pipeline_mode<synchronous>, transform_indices = @transform_3, window_bounds = array<i64: 2, 4>}, {pipeline_mode = #tpu.pipeline_mode<synchronous>, transform_indices = @transform_4, window_bounds = array<i64: 1, 4>}, {transform_indices = @transform_5, window_bounds = array<i64: 2, 4, 256>}]} {
    %c0 = arith.constant 0 : index
    %c0_0 = arith.constant 0 : index
    %c0_1 = arith.constant 0 : index
    %0 = vector.load %arg1[%c0, %c0_0, %c0_1] : memref<2x4x256xf32, #tpu.memory_space<vmem>>, vector<2x4x256xf32>
    %cst = arith.constant dense<0.000000e+00> : vector<2x4xf32>
    %1 = vector.multi_reduction <add>, %0, %cst [2] : vector<2x4x256xf32> to vector<2x4xf32>
    %cst_2 = arith.constant 3.906250e-03 : f32
    %2 = vector.broadcast %cst_2 : f32 to vector<2x4xf32>
    %3 = arith.mulf %1, %2 : vector<2x4xf32>
    %c0_3 = arith.constant 0 : index
    %c0_4 = arith.constant 0 : index
    %4 = vector.load %arg2[%c0_3, %c0_4] : memref<4x2xf32, #tpu.memory_space<vmem>>, vector<4x2xf32>
    %cst_5 = arith.constant dense<0.000000e+00> : vector<2x2xf32>
    %5 = tpu.matmul %3, %4, %cst_5 {dimension_numbers = #tpu.dot_dimension_numbers<[1], [0], [0], [1], [0, 0, 1, 1], [], []>} : vector<2x4xf32>, vector<4x2xf32>, vector<2x2xf32> -> vector<2x2xf32>
    %c0_6 = arith.constant 0 : index
    %c0_7 = arith.constant 0 : index
    %6 = vector.load %arg3[%c0_6, %c0_7] : memref<1x2xf32, #tpu.memory_space<vmem>>, vector<1x2xf32>
    %7 = vector.broadcast %6 : vector<1x2xf32> to vector<2x2xf32>
    %8 = arith.addf %5, %7 : vector<2x2xf32>
    %cst_8 = arith.constant 0.000000e+00 : f32
    %9 = vector.broadcast %cst_8 : f32 to vector<2x2xf32>
    %10 = arith.maximumf %8, %9 : vector<2x2xf32>
    %c0_9 = arith.constant 0 : index
    %c0_10 = arith.constant 0 : index
    %11 = vector.load %arg4[%c0_9, %c0_10] : memref<2x4xf32, #tpu.memory_space<vmem>>, vector<2x4xf32>
    %cst_11 = arith.constant dense<0.000000e+00> : vector<2x4xf32>
    %12 = tpu.matmul %10, %11, %cst_11 {dimension_numbers = #tpu.dot_dimension_numbers<[1], [0], [0], [1], [0, 0, 1, 1], [], []>} : vector<2x2xf32>, vector<2x4xf32>, vector<2x4xf32> -> vector<2x4xf32>
    %c0_12 = arith.constant 0 : index
    %c0_13 = arith.constant 0 : index
    %13 = vector.load %arg5[%c0_12, %c0_13] : memref<1x4xf32, #tpu.memory_space<vmem>>, vector<1x4xf32>
    %14 = vector.broadcast %13 : vector<1x4xf32> to vector<2x4xf32>
    %15 = arith.addf %12, %14 : vector<2x4xf32>
    %cst_14 = arith.constant 3.000000e+00 : f32
    %16 = vector.broadcast %cst_14 : f32 to vector<2x4xf32>
    %17 = arith.addf %15, %16 : vector<2x4xf32>
    %cst_15 = arith.constant 0.000000e+00 : f32
    %cst_16 = arith.constant 6.000000e+00 : f32
    %18 = vector.broadcast %cst_15 : f32 to vector<2x4xf32>
    %19 = arith.maximumf %18, %17 : vector<2x4xf32>
    %20 = vector.broadcast %cst_16 : f32 to vector<2x4xf32>
    %21 = arith.minimumf %20, %19 : vector<2x4xf32>
    %cst_17 = arith.constant 0.166666672 : f32
    %22 = vector.broadcast %cst_17 : f32 to vector<2x4xf32>
    %23 = arith.mulf %21, %22 : vector<2x4xf32>
    %24 = vector.shape_cast %23 : vector<2x4xf32> to vector<2x4x1xf32>
    %25 = vector.broadcast %24 : vector<2x4x1xf32> to vector<2x4x256xf32>
    %26 = arith.mulf %0, %25 : vector<2x4x256xf32>
    %c0_18 = arith.constant 0 : index
    %c0_19 = arith.constant 0 : index
    %c0_20 = arith.constant 0 : index
    %27 = vector.load %arg6[%c0_18, %c0_19, %c0_20] : memref<2x4x256xf32, #tpu.memory_space<vmem>>, vector<2x4x256xf32>
    tpu.vector_store %arg6[%c0_18, %c0_19, %c0_20], %26 {strides = array<i32>} : memref<2x4x256xf32, #tpu.memory_space<vmem>>, vector<2x4x256xf32>,
    return
  }
  func.func @transform_0(%arg0: i32) -> (i32, i32, i32) {
    %c0_i32 = arith.constant 0 : i32
    %c0_i32_0 = arith.constant 0 : i32
    %c0_i32_1 = arith.constant 0 : i32
    return %arg0, %c0_i32, %c0_i32_0 : i32, i32, i32
  }
  func.func @transform_1(%arg0: i32) -> (i32, i32) {
    %c0_i32 = arith.constant 0 : i32
    %c0_i32_0 = arith.constant 0 : i32
    %c0_i32_1 = arith.constant 0 : i32
    return %c0_i32, %c0_i32_0 : i32, i32
  }
  func.func @transform_2(%arg0: i32) -> (i32, i32) {
    %c0_i32 = arith.constant 0 : i32
    %c0_i32_0 = arith.constant 0 : i32
    %c0_i32_1 = arith.constant 0 : i32
    return %c0_i32, %c0_i32_0 : i32, i32
  }
  func.func @transform_3(%arg0: i32) -> (i32, i32) {
    %c0_i32 = arith.constant 0 : i32
    %c0_i32_0 = arith.constant 0 : i32
    %c0_i32_1 = arith.constant 0 : i32
    return %c0_i32, %c0_i32_0 : i32, i32
  }
  func.func @transform_4(%arg0: i32) -> (i32, i32) {
    %c0_i32 = arith.constant 0 : i32
    %c0_i32_0 = arith.constant 0 : i32
    %c0_i32_1 = arith.constant 0 : i32
    return %c0_i32, %c0_i32_0 : i32, i32
  }
  func.func @transform_5(%arg0: i32) -> (i32, i32, i32) {
    %c0_i32 = arith.constant 0 : i32
    %c0_i32_0 = arith.constant 0 : i32
    %c0_i32_1 = arith.constant 0 : i32
    return %arg0, %c0_i32, %c0_i32_0 : i32, i32, i32
  }
}

</mosaic_0001>

<llo_original>
// kernel: tpu_custom_call.1
$region0: #{tpu_custom_call.1}
  #allocation0 [shape = 'u32[]', space=smem, size = 0x4, offset = 0x4, fixed_abs, tag = 'smem constant byte address 0x4 - core index']
  #allocation1 [shape = 'u32[144,128]{1,0:T(1,128)}', space=vmem, size = 0x12000, scoped, tag = 'internal scratch']
  %s0 = inlined_call_operand.hbm [shape: f32[2,4,256], index: 0, kind: input, shape index: {}]
  %s1 = inlined_call_operand.vmem [shape: f32[4,2], index: 1, kind: input, shape index: {}]
  %s2 = inlined_call_operand.vmem [shape: f32[1,2], index: 2, kind: input, shape index: {}]
  %s3 = inlined_call_operand.vmem [shape: f32[2,4], index: 3, kind: input, shape index: {}]
  %s4 = inlined_call_operand.vmem [shape: f32[1,4], index: 4, kind: input, shape index: {}]
  %s5 = inlined_call_operand.hbm [shape: f32[2,4,256], index: 5, kind: output, shape index: {}]
  %s6 = sld [smem:[#allocation0]]
  $region34: #{tpu_custom_call.1} parent=0
    _
  %s8 = ssub.s32 1, %s6
  %s9 = scalar_select 0, %s8, %s6
  $region1: #{tpu_custom_call.1} parent=0
    #allocation2 [shape = 'u8[8192]{0}', space=vmem, size = 0x2000, scoped, tag = 'input window, operand 0, single buffered']
    #allocation3 [shape = 's32[1]{0}', space=sflag, size = 0x4, scoped, tag = 'scoped memory for tpu_custom_call.1']
    #allocation4 [shape = 's32[1]{0}', space=sflag, size = 0x4, scoped, tag = 'scoped memory for tpu_custom_call.1']
    #allocation5 [shape = 'u8[8192]{0}', space=vmem, size = 0x2000, scoped, tag = 'output window, operand 0, single buffered']
    %10 = vsyncpa [#allocation3], 0
    %11 = vsyncpa [#allocation4], 0
    // Predicated region
    $region2: #{tpu_custom_call.1} parent=1 // pred_check
      _
    $region3: #{tpu_custom_call.1} parent=1 // pred_check_branch
      %13 = sbr.rel (0) target = $region5
    $region4: #{tpu_custom_call.1} parent=1 // pred_region
      %s15 = ssub.s32 256, 256
      %16 = vsyncadd [#allocation3], %s15
      %s17 = sshll.u32 [#allocation2], 4
      %s18 = int_to_ptr.vmem [resolvable:$true] %s17
      %23 = dma.hbm_to_vmem [thread:$0]  %s0, 256, %s18, [#allocation3], 128, 128, 8
    $region5: #{tpu_custom_call.1} parent=1 // pred_fallthru
      _
    // Predicated region
    $region6: #{tpu_custom_call.1} parent=1 // pred_check
      _
    $region7: #{tpu_custom_call.1} parent=1 // pred_check_branch
      %25 = sbr.rel (0) target = $region9
    $region8: #{tpu_custom_call.1} parent=1 // pred_region
      _
    $region9: #{tpu_custom_call.1} parent=1 // pred_fallthru
      _
    // Predicated region
    $region10: #{tpu_custom_call.1} parent=1 // pred_check
      _
    $region11: #{tpu_custom_call.1} parent=1 // pred_check_branch
      %27 = sbr.rel (0) target = $region13
    $region12: #{tpu_custom_call.1} parent=1 // pred_region
      _
    $region13: #{tpu_custom_call.1} parent=1 // pred_fallthru
      _
    // Predicated region
    $region14: #{tpu_custom_call.1} parent=1 // pred_check
      _
    $region15: #{tpu_custom_call.1} parent=1 // pred_check_branch
      %29 = sbr.rel (0) target = $region17
    $region16: #{tpu_custom_call.1} parent=1 // pred_region
      _
    $region17: #{tpu_custom_call.1} parent=1 // pred_fallthru
      _
    // Predicated region
    $region18: #{tpu_custom_call.1} parent=1 // pred_check
      _
    $region19: #{tpu_custom_call.1} parent=1 // pred_check_branch
      %31 = sbr.rel (0) target = $region21
    $region20: #{tpu_custom_call.1} parent=1 // pred_region
      _
    $region21: #{tpu_custom_call.1} parent=1 // pred_fallthru
      _
    // Predicated region
    $region22: #{tpu_custom_call.1} parent=1 // pred_check
      _
    $region23: #{tpu_custom_call.1} parent=1 // pred_check_branch
      %33 = sbr.rel (0) target = $region25
    $region24: #{tpu_custom_call.1} parent=1 // pred_region
      %34 = dma.done [#allocation3], 256
    $region25: #{tpu_custom_call.1} parent=1 // pred_fallthru
      _
    %v35 = vld [vmem:[#allocation2] sm:$0xff]
    %v36 = vld [vmem:[#allocation2 + $0x8] sm:$0xff]
    %v39 = vcombine.high %v35, %v35
    %v40 = vcombine.high %v36, %v36
    %vm43 = vcmask 1043456
    %v44 = vsel %vm43, %v35, 0.0
    %v45 = vsel %vm43, %v39, 0.0
    %v46 = vadd.f32 %v44, %v45
    %47 = vadd.xlane.f32.xlu0 %v46
    %v48 = vpop.xlane.xlu0 %47
    %v49 = vsel %vm43, %v36, 0.0
    %v50 = vsel %vm43, %v40, 0.0
    %v51 = vadd.f32 %v49, %v50
    %52 = vadd.xlane.f32.xlu0 %v51
    %v53 = vpop.xlane.xlu0 %52
    %v54 = vmul.f32 %v48, 0.00390625
    %v55 = vmul.f32 %v53, 0.00390625
    %v56 = vld [vmem:[%s1] sm:$0xf]
    %v57 = vld [vmem:[%s2] sm:$0x1]
    %v59 = vlaneseq
    %v60 = vshrl.u32 %v59, 7
    %v61 = vsub.s32 0, %v60
    %v62 = vrot.slane %v57, %v61
    %v66 = vlaneseq
    %v67 = vand.u32 %v66, 127
    %v68 = vlaneseq
    %v69 = vshrl.u32 %v68, 7
    %v70 = vsub.s32 %v67, %v69
    %v71 = vrot.slane %v54, %v70
    %v72 = vlaneseq
    %v73 = vshrl.u32 %v72, 7
    %v74 = vsub.s32 %v67, %v73
    %v75 = vrot.slane %v55, %v74
    %vm76 = vcmask 1041409
    %v77 = vsel %vm76, %v75, %v71
    %vm78 = vcmask 31744
    %v79 = vsel %vm78, %v77, 0
    %v82 = vsel %vm43, %v56, 0
    %84 = vmatprep.subr.mxu0 0.0
    %85 = vmatpush1.msra.mxu0 %v82
    %86 = vmatprep.subr.mxu0 0.0
    %87 = vmatpush1.msra.mxu0 0.0
    %88 = vmatprep.subr.mxu0 0.0
    %89 = vmatpush1.msra.mxu0 0.0
    %90 = vmatprep.subr.mxu0 0.0
    %91 = vmatpush1.msra.mxu0 0.0
    %92 = vmatprep.subr.mxu0 0.0
    %93 = vmatpush1.msra.mxu0 0.0
    %94 = vmatprep.subr.mxu0 0.0
    %95 = vmatpush1.msra.mxu0 0.0
    %96 = vmatprep.subr.mxu0 0.0
    %97 = vmatpush1.msra.mxu0 0.0
    %98 = vmatprep.subr.mxu0 0.0
    %99 = vmatpush1.msra.mxu0 0.0
    %100 = vmatprep.subr.mxu0 0.0
    %101 = vmatpush1.msra.mxu0 0.0
    %102 = vmatprep.subr.mxu0 0.0
    %103 = vmatpush1.msra.mxu0 0.0
    %104 = vmatprep.subr.mxu0 0.0
    %105 = vmatpush1.msra.mxu0 0.0
    %106 = vmatprep.subr.mxu0 0.0
    %107 = vmatpush1.msra.mxu0 0.0
    %108 = vmatprep.subr.mxu0 0.0
    %109 = vmatpush1.msra.mxu0 0.0
    %110 = vmatprep.subr.mxu0 0.0
    %111 = vmatpush1.msra.mxu0 0.0
    %112 = vmatprep.subr.mxu0 0.0
    %113 = vmatpush1.msra.mxu0 0.0
    %114 = vmatprep.subr.mxu0 0.0
    %115 = vmatpush1.msra.mxu0 0.0
    %116 = vmatprep.subr.mxu0 0.0
    %117 = vmatpush1.msra.mxu0 0.0
    %118 = vmatprep.subr.mxu0 0.0
    %119 = vmatpush1.msra.mxu0 0.0
    %120 = vmatprep.subr.mxu0 0.0
    %121 = vmatpush1.msra.mxu0 0.0
    %122 = vmatprep.subr.mxu0 0.0
    %123 = vmatpush1.msra.mxu0 0.0
    %124 = vmatprep.subr.mxu0 0.0
    %125 = vmatpush1.msra.mxu0 0.0
    %126 = vmatprep.subr.mxu0 0.0
    %127 = vmatpush1.msra.mxu0 0.0
    %128 = vmatprep.subr.mxu0 0.0
    %129 = vmatpush1.msra.mxu0 0.0
    %130 = vmatprep.subr.mxu0 0.0
    %131 = vmatpush1.msra.mxu0 0.0
    %132 = vmatprep.subr.mxu0 0.0
    %133 = vmatpush1.msra.mxu0 0.0
    %134 = vmatprep.subr.mxu0 0.0
    %135 = vmatpush1.msra.mxu0 0.0
    %136 = vmatprep.subr.mxu0 0.0
    %137 = vmatpush1.msra.mxu0 0.0
    %138 = vmatprep.subr.mxu0 0.0
    %139 = vmatpush1.msra.mxu0 0.0
    %140 = vmatprep.subr.mxu0 0.0
    %141 = vmatpush1.msra.mxu0 0.0
    %142 = vmatprep.subr.mxu0 0.0
    %143 = vmatpush1.msra.mxu0 0.0
    %144 = vmatprep.subr.mxu0 0.0
    %145 = vmatpush1.msra.mxu0 0.0
    %146 = vmatprep.subr.mxu0 0.0
    %147 = vmatpush1.msra.mxu0 0.0
    %148 = vmatprep.mubr.f32.mxu0 0.0
    %149 = vmatmul.mubr.f32.gmra.mrb[0].mxu0 %v79
    %v150 = vpop.f32.mrb[0].mxu0
    %v151 = vadd.f32 %v62, %v150
    %v152 = vpop.f32.mrb[0].mxu0
    %153 = vdwg.mxu0
    %v154 = vmax.f32 %v151, 0.0
    %v155 = vld [vmem:[%s3] sm:$0x3]
    %v156 = vld [vmem:[%s4] sm:$0x1]
    %v158 = vlaneseq
    %v159 = vshrl.u32 %v158, 7
    %v160 = vsub.s32 0, %v159
    %v161 = vrot.slane %v156, %v160
    %vm163 = vcmask 15360
    %v165 = vsel %vm163, %v154, 0
    %vm167 = vcmask 1041408
    %v169 = vsel %vm167, %v155, 0
    %171 = vmatprep.subr.mxu0 0.0
    %172 = vmatpush1.msra.mxu0 %v169
    %173 = vmatprep.subr.mxu0 0.0
    %174 = vmatpush1.msra.mxu0 0.0
    %175 = vmatprep.subr.mxu0 0.0
    %176 = vmatpush1.msra.mxu0 0.0
    %177 = vmatprep.subr.mxu0 0.0
    %178 = vmatpush1.msra.mxu0 0.0
    %179 = vmatprep.subr.mxu0 0.0
    %180 = vmatpush1.msra.mxu0 0.0
    %181 = vmatprep.subr.mxu0 0.0
    %182 = vmatpush1.msra.mxu0 0.0
    %183 = vmatprep.subr.mxu0 0.0
    %184 = vmatpush1.msra.mxu0 0.0
    %185 = vmatprep.subr.mxu0 0.0
    %186 = vmatpush1.msra.mxu0 0.0
    %187 = vmatprep.subr.mxu0 0.0
    %188 = vmatpush1.msra.mxu0 0.0
    %189 = vmatprep.subr.mxu0 0.0
    %190 = vmatpush1.msra.mxu0 0.0
    %191 = vmatprep.subr.mxu0 0.0
    %192 = vmatpush1.msra.mxu0 0.0
    %193 = vmatprep.subr.mxu0 0.0
    %194 = vmatpush1.msra.mxu0 0.0
    %195 = vmatprep.subr.mxu0 0.0
    %196 = vmatpush1.msra.mxu0 0.0
    %197 = vmatprep.subr.mxu0 0.0
    %198 = vmatpush1.msra.mxu0 0.0
    %199 = vmatprep.subr.mxu0 0.0
    %200 = vmatpush1.msra.mxu0 0.0
    %201 = vmatprep.subr.mxu0 0.0
    %202 = vmatpush1.msra.mxu0 0.0
    %203 = vmatprep.subr.mxu0 0.0
    %204 = vmatpush1.msra.mxu0 0.0
    %205 = vmatprep.subr.mxu0 0.0
    %206 = vmatpush1.msra.mxu0 0.0
    %207 = vmatprep.subr.mxu0 0.0
    %208 = vmatpush1.msra.mxu0 0.0
    %209 = vmatprep.subr.mxu0 0.0
    %210 = vmatpush1.msra.mxu0 0.0
    %211 = vmatprep.subr.mxu0 0.0
    %212 = vmatpush1.msra.mxu0 0.0
    %213 = vmatprep.subr.mxu0 0.0
    %214 = vmatpush1.msra.mxu0 0.0
    %215 = vmatprep.subr.mxu0 0.0
    %216 = vmatpush1.msra.mxu0 0.0
    %217 = vmatprep.subr.mxu0 0.0
    %218 = vmatpush1.msra.mxu0 0.0
    %219 = vmatprep.subr.mxu0 0.0
    %220 = vmatpush1.msra.mxu0 0.0
    %221 = vmatprep.subr.mxu0 0.0
    %222 = vmatpush1.msra.mxu0 0.0
    %223 = vmatprep.subr.mxu0 0.0
    %224 = vmatpush1.msra.mxu0 0.0
    %225 = vmatprep.subr.mxu0 0.0
    %226 = vmatpush1.msra.mxu0 0.0
    %227 = vmatprep.subr.mxu0 0.0
    %228 = vmatpush1.msra.mxu0 0.0
    %229 = vmatprep.subr.mxu0 0.0
    %230 = vmatpush1.msra.mxu0 0.0
    %231 = vmatprep.subr.mxu0 0.0
    %232 = vmatpush1.msra.mxu0 0.0
    %233 = vmatprep.subr.mxu0 0.0
    %234 = vmatpush1.msra.mxu0 0.0
    %235 = vmatprep.mubr.f32.mxu0 0.0
    %236 = vmatmul.mubr.f32.gmra.mrb[0].mxu0 %v165
    %v237 = vpop.f32.mrb[0].mxu0
    %v238 = vadd.f32 %v161, %v237
    %v239 = vpop.f32.mrb[0].mxu0
    %240 = vdwg.mxu0
    %v241 = vadd.f32 %v238, 3.0
    %v242 = vmax.f32 %v241, 0.0
    %v243 = vmin.f32 %v242, 6.0
    %v244 = vmul.f32 %v243, 0.16666667
    %v245 = vlaneseq
    %v246 = vshrl.u32 %v245, 7
    %v247 = vsub.s32 0, %v246
    %v248 = vrot.slane %v244, %v247
    %250 = vbcast.lane.b32.xlu0 %v248, 256
    %v251 = vpop.permute.xlu0 %250
    %v252 = vlaneseq
    %v253 = vshrl.u32 %v252, 7
    %v254 = vsub.s32 1, %v253
    %v255 = vrot.slane %v244, %v254
    %257 = vbcast.lane.b32.xlu0 %v255, 256
    %v258 = vpop.permute.xlu0 %257
    %v262 = vunpack.c.l.s4 839922192
    %v263 = vunpack.c.0.s8 %v262
    %v264 = vlaneseq
    %v265 = vshrl.u32 %v264, 7
    %v266 = vsub.s32 %v263, %v265
    %v267 = vrot.slane %v251, %v266
    %v269 = vunpack.c.l.s4 839922192
    %v270 = vunpack.c.0.s8 %v269
    %v271 = vlaneseq
    %v272 = vshrl.u32 %v271, 7
    %v273 = vsub.s32 %v270, %v272
    %v274 = vrot.slane %v258, %v273
    %v277 = vmul.f32 %v35, %v267
    %v278 = vmul.f32 %v36, %v274
    %279 = vst [vmem:[#allocation5] sm:$0xff] %v277
    %280 = vst [vmem:[#allocation5 + $0x8] sm:$0xff] %v278
    // Predicated region
    $region26: #{tpu_custom_call.1} parent=1 // pred_check
      _
    $region27: #{tpu_custom_call.1} parent=1 // pred_check_branch
      %282 = sbr.rel (0) target = $region29
    $region28: #{tpu_custom_call.1} parent=1 // pred_region
      %s284 = ssub.s32 256, 256
      %285 = vsyncadd [#allocation4], %s284
      %s286 = sshll.u32 [#allocation5], 4
      %s287 = int_to_ptr.vmem [resolvable:$true] %s286
      %292 = dma.vmem_to_hbm [thread:$0]  %s287, 256, %s5, [#allocation4], 128, 128, 8
    $region29: #{tpu_custom_call.1} parent=1 // pred_fallthru
      _
    // Predicated region
    $region30: #{tpu_custom_call.1} parent=1 // pred_check
      _
    $region31: #{tpu_custom_call.1} parent=1 // pred_check_branch
      %294 = sbr.rel (0) target = $region33
    $region32: #{tpu_custom_call.1} parent=1 // pred_region
      %295 = dma.done [#allocation4], 256
    $region33: #{tpu_custom_call.1} parent=1 // pred_fallthru
      _
    %296 = vsyncpa [#allocation3], 1
    %297 = vsyncpa [#allocation4], 1

</llo_original>
